<compile_context>
chip_gen: v5e
topology: v5e:2x2
jax: 0.10.0
libtpu: 0.0.40
codegen_flags: <defaults>
</compile_context>

<pallas_src>
import functools

import jax
import jax.numpy as jnp
import numpy as np
from jax.experimental import pallas as pl
from jax.experimental.pallas import tpu as pltpu


def _round_up(a: int, b: int) -> int:
    return -(-a // b) * b


def _spectral_pool_matrix(T: int, T_new: int) -> np.ndarray:
    """Real (T_new, T) matrix implementing DFT -> low-freq crop -> IDFT -> Re."""
    j = np.arange(T_new)
    freq_j = np.where(j < (T_new + 1) // 2, j, j - T_new)      # kept frequency bins
    sel = np.mod(freq_j, T)                                    # indices into length-T fft

    t = np.arange(T)
    k = sel[:, None]                                           # (T_new, 1)
    F_sel = np.exp(-2j * np.pi * k * t[None, :] / T)           # forward DFT rows, (T_new, T)
    tp = np.arange(T_new)[:, None]
    kp = np.arange(T_new)[None, :]
    G = np.exp(2j * np.pi * tp * kp / T_new) / T_new           # inverse DFT, (T_new, T_new)
    return np.real(G @ F_sel).astype(np.float32)               # (T_new, T), real


def _spectral_pool_kernel(p_ref, x_ref, o_ref):
    # p_ref: (tm, T) bf16  (VMEM-resident pooling matrix tile)
    # x_ref: (1, T, F)     (natural-layout input slab, input dtype)
    # o_ref: (1, tm, F)    (natural-layout output slab, input dtype)
    x_bf = x_ref[0].astype(jnp.bfloat16)
    y = jnp.dot(p_ref[...], x_bf, preferred_element_type=jnp.float32)
    o_ref[0] = y.astype(o_ref.dtype)                           # single final-dtype write


def _vmem_budget_bytes() -> int:
    """VMEM budget with headroom; adapts to the generation (64 MiB v7x vs 128 MiB v5e/v6e)."""
    try:
        cap = int(pltpu.get_tpu_info().vmem_capacity_bytes)
    except Exception:
        cap = 64 * 1024 * 1024          # conservative (v7x-sized) fallback
    return max(32 * 1024 * 1024, int(cap * 0.6))


def _choose_tm(T_new: int, T: int, F: int, itemsize: int, budget: int):
    """Largest M (T_new) tile that fits VMEM.  Normally tm == T_new (no M tiling)."""
    x_buf = 2 * T * F * itemsize                    # double-buffered input slab
    fixed = x_buf + T * F * 2                       # + in-kernel bf16 copy of x
    per_row = 2 * T * 2 + 2 * F * itemsize + F * 4  # P dbl-buf (bf16) + out dbl-buf + f32 dot temp
    if fixed + T_new * per_row <= budget:
        return T_new, T_new                         # whole P resident, single M block
    # Fallback for very long sequences: largest 8-aligned tm that fits.
    # TODO(synk): if even tm=8 does not fit (absurd T*F), a K-tiled accumulator path is needed.
    avail = max(budget - fixed, per_row * 8)
    tm = max(8, (avail // per_row) // 8 * 8)
    tm = min(tm, _round_up(T_new, 8))
    return tm, _round_up(T_new, tm)


@functools.partial(jax.jit, static_argnames=("factor",))
def pooling_layer(x: jnp.ndarray, factor: float = 0.75) -> jnp.ndarray:
    """x: [batch, 1, time, freq] -> [batch, 1, int(factor*time), freq] (spectral pooling)."""
    B, C, T, F = x.shape
    T_new = int(T * factor)     # matches SpectralPool2d's int(scale * size) truncation
    G = B * C

    budget = _vmem_budget_bytes()
    tm, Mp = _choose_tm(T_new, T, F, x.dtype.itemsize, budget)
    n_m = Mp // tm

    P = _spectral_pool_matrix(T, T_new)                         # numpy, trace-time
    if Mp != T_new:
        P = np.pad(P, ((0, Mp - T_new), (0, 0)))
    p_bf = jnp.asarray(P, dtype=jnp.bfloat16)                   # compile-time constant

    x3 = x.reshape(G, T, F)                                     # free reshape (fold B*C)

    out = pl.pallas_call(
        _spectral_pool_kernel,
        out_shape=jax.ShapeDtypeStruct((G, Mp, F), x.dtype),
        grid=(n_m, G),                                          # g innermost -> P DMA'd once per m
        in_specs=[
            pl.BlockSpec((tm, T), lambda m, g: (m, 0)),         # pooling matrix (resident)
            pl.BlockSpec((1, T, F), lambda m, g: (g, 0, 0)),    # natural-layout input slab
        ],
        out_specs=pl.BlockSpec((1, tm, F), lambda m, g: (g, m, 0)),
        compiler_params=pltpu.CompilerParams(
            dimension_semantics=("parallel", "parallel"),       # no reduction grid axis
            vmem_limit_bytes=budget,
        ),
    )(p_bf, x3)

    if Mp != T_new:                                             # only in the huge-T fallback
        out = out[:, :T_new, :]
    return out.reshape(B, C, T_new, F)                          # free reshape back


def _reference(x: jnp.ndarray, factor: float = 0.75) -> jnp.ndarray:
    """Pure-JAX FFT reference for the same spectral pooling semantics."""
    T = x.shape[2]
    T_new = int(T * factor)
    j = np.arange(T_new)
    freq_j = np.where(j < (T_new + 1) // 2, j, j - T_new)
    sel = np.mod(freq_j, T)
    X = jnp.fft.fft(x.astype(jnp.complex64), axis=2)
    Xc = X[:, :, sel, :]
    y = jnp.fft.ifft(Xc, axis=2)
    return jnp.real(y).astype(x.dtype)


if __name__ == "__main__":
    key = jax.random.PRNGKey(0)
    B, C, T, F = 2, 1, 16, 16          # [batch, 1, time, frequency]
    x = jax.random.normal(key, (B, C, T, F), dtype=jnp.float32)

    out = jax.block_until_ready(pooling_layer(x, factor=0.75))
    ref = jax.block_until_ready(_reference(x, factor=0.75))

    assert out.shape == (B, C, int(0.75 * T), F), out.shape
    # bf16 MXU operands with f32 accumulation -> bf16-level tolerance vs the FFT reference.
    assert jnp.allclose(out, ref, atol=7.5e-2, rtol=7.5e-2), float(jnp.abs(out - ref).max())

    print("KERNEL_OK")
</pallas_src>

<mosaic_0001>
module attributes {stable_mosaic.version = 11 : i64} {
  func.func @_spectral_pool_kernel(%arg0: i32, %arg1: i32, %arg2: memref<12x16xbf16, #tpu.memory_space<vmem>>, %arg3: memref<1x16x16xf32, #tpu.memory_space<vmem>>, %arg4: memref<1x12x16xf32, #tpu.memory_space<vmem>>) attributes {dimension_semantics = [#tpu.dimension_semantics<parallel>, #tpu.dimension_semantics<parallel>], iteration_bounds = array<i64: 1, 2>, scalar_prefetch = 0 : i64, scratch_operands = 0 : i64, tpu.core_type = #tpu.core_type<tc>, window_params = [{transform_indices = @transform_0, window_bounds = array<i64: 12, 16>}, {transform_indices = @transform_1, window_bounds = array<i64: 1, 16, 16>}, {transform_indices = @transform_2, window_bounds = array<i64: 1, 12, 16>}]} {
    %c0 = arith.constant 0 : index
    %c0_0 = arith.constant 0 : index
    %c0_1 = arith.constant 0 : index
    %0 = vector.load %arg3[%c0, %c0_0, %c0_1] : memref<1x16x16xf32, #tpu.memory_space<vmem>>, vector<1x16x16xf32>
    %1 = vector.shape_cast %0 : vector<1x16x16xf32> to vector<16x16xf32>
    %2 = arith.truncf %1 : vector<16x16xf32> to vector<16x16xbf16>
    %c0_2 = arith.constant 0 : index
    %c0_3 = arith.constant 0 : index
    %3 = vector.load %arg2[%c0_2, %c0_3] : memref<12x16xbf16, #tpu.memory_space<vmem>>, vector<12x16xbf16>
    %cst = arith.constant dense<0.000000e+00> : vector<12x16xf32>
    %4 = tpu.matmul %3, %2, %cst {dimension_numbers = #tpu.dot_dimension_numbers<[1], [0], [0], [1], [0, 0, 1, 1], [], []>} : vector<12x16xbf16>, vector<16x16xbf16>, vector<12x16xf32> -> vector<12x16xf32>
    %c0_4 = arith.constant 0 : index
    %c0_5 = arith.constant 0 : index
    %c0_6 = arith.constant 0 : index
    %5 = vector.load %arg4[%c0_4, %c0_5, %c0_6] : memref<1x12x16xf32, #tpu.memory_space<vmem>>, vector<1x12x16xf32>
    %6 = vector.shape_cast %5 : vector<1x12x16xf32> to vector<12x16xf32>
    %7 = vector.shape_cast %4 : vector<12x16xf32> to vector<1x12x16xf32>
    tpu.vector_store %arg4[%c0_4, %c0_5, %c0_6], %7 {strides = array<i32>} : memref<1x12x16xf32, #tpu.memory_space<vmem>>, vector<1x12x16xf32>,
    return
  }
  func.func @transform_0(%arg0: i32, %arg1: i32) -> (i32, i32) {
    %c0_i32 = arith.constant 0 : i32
    %c0_i32_0 = arith.constant 0 : i32
    return %arg0, %c0_i32 : i32, i32
  }
  func.func @transform_1(%arg0: i32, %arg1: i32) -> (i32, i32, i32) {
    %c0_i32 = arith.constant 0 : i32
    %c0_i32_0 = arith.constant 0 : i32
    %c0_i32_1 = arith.constant 0 : i32
    return %arg1, %c0_i32, %c0_i32_0 : i32, i32, i32
  }
  func.func @transform_2(%arg0: i32, %arg1: i32) -> (i32, i32, i32) {
    %c0_i32 = arith.constant 0 : i32
    %c0_i32_0 = arith.constant 0 : i32
    return %arg1, %arg0, %c0_i32 : i32, i32, i32
  }
}

</mosaic_0001>

<llo_original>
// kernel: pooling_layer.1
$region0: #{pooling_layer.1}
  #allocation0 [shape = 'u32[]', space=smem, size = 0x4, offset = 0x4, fixed_abs, tag = 'smem constant byte address 0x4 - core index']
  #allocation1 [shape = 'u32[72,128]{1,0:T(1,128)}', space=vmem, size = 0x9000, scoped, tag = 'internal scratch']
  %s0 = inlined_call_operand.hbm [shape: bf16[12,16], index: 0, kind: input, shape index: {}]
  %s1 = inlined_call_operand.hbm [shape: f32[2,16,16], index: 1, kind: input, shape index: {}]
  %s2 = inlined_call_operand.vmem [shape: f32[2,12,16], index: 2, kind: output, shape index: {}]
  %s3 = sld [smem:[#allocation0]]
  $region49: #{pooling_layer.1} parent=0
    _
  %s5 = ssub.s32 1, %s3
  %s6 = scalar_select 0, %s5, %s3
  $region1: #{pooling_layer.1} parent=0
    #allocation2 [shape = 'u8[4096]{0}', space=vmem, size = 0x1000, scoped, tag = 'input window, operand 0, single buffered']
    #allocation3 [shape = 's32[2]{0}', space=sflag, size = 0x8, scoped, tag = 'scoped memory for pooling_layer.1']
    #allocation4 [shape = 'u8[16384]{0}', space=vmem, size = 0x4000, scoped, tag = 'input window, operand 1']
    #allocation5 [shape = 's32[2]{0}', space=sflag, size = 0x8, scoped, tag = 'scoped memory for pooling_layer.1']
    %7 = vsyncpa [#allocation3], 0
    %8 = vsyncpa [#allocation5], 0
    %s9 = scalar_lea.sflag [#allocation5], 1
    %10 = vsyncpa %s9, 0
    loop: start=0, step=1, limit=4
    $region2: #{pooling_layer.1} parent=1 // loop_pre_header
      _
    $region3: #{pooling_layer.1} parent=1 // loop_header
      %s12 = sphi 0, %s16
      %p13 = scmp.ge.s32.totalorder %s12, 4
      %s19 = sphi 0, %s31
      %s20 = sphi 0, %s27
      %s21 = sphi 0, %s19
      %s22 = sphi 0, %s20
      %s23 = sphi 0, %s21
      %s24 = sphi 0, %s22
      %s34 = sphi 0, %s36
      %s37 = sphi 0, %s34
      %s38 = sphi 0, %s37
      %s54 = sphi 0, %s38
      %s60 = sphi 0, %s62
      %s63 = sphi 0, %s60
      %s64 = sphi 0, %s63
      %s80 = sphi 0, %s64
      %s88 = sphi 0, %s90
      %s91 = sphi 0, %s88
      %s92 = sphi 0, %s91
      %s108 = sphi 0, %s92
    $region4: #{pooling_layer.1} parent=1 // loop_header_branch
      %15 = sbr.rel (%p13) target = $region8
    $region5: #{pooling_layer.1} parent=1 // loop_body
      %s17 = ssub.s32 %s12, 1
      %s18 = ssub.s32 %s12, 2
      %s25 = sadd.s32 1, %s20
      %p26 = scmp.ge.s32.totalorder %s25, 2
      %s27 = scalar_select %p26, 0, %s25
      %s28 = sadd.s32 1, %s19
      %s29 = scalar_select %p26, %s28, %s19
      %p30 = scmp.ge.s32.totalorder %s29, 1
      %s31 = scalar_select %p30, 0, %s29
      %s32 = ssub.s32 %s19, %s31
      %p33 = scmp.eq.s32.totalorder %s32, 0
      %s35 = sadd.s32 %s34, 1
      %s36 = scalar_select %p33, %s34, %s35
      %p39 = pneg %p33
      %p40 = scmp.eq.s32.totalorder %s12, 1
      %p41 = por %p39, %p40
      %p42 = scmp.ne.s32.totalorder %s34, %s37
      %p43 = scmp.eq.s32.totalorder %s12, 0
      %p44 = por %p42, %p43
      %p45 = scmp.ne.s32.totalorder %s34, %s37
      %p46 = scmp.eq.s32.totalorder %s17, 1
      %p47 = por %p45, %p46
      %p48 = scmp.ne.s32.totalorder %s37, %s38
      %p49 = scmp.eq.s32.totalorder %s17, 0
      %p50 = por %p48, %p49
      %p51 = scmp.ne.s32.totalorder %s37, %s38
      %p52 = scmp.eq.s32.totalorder %s18, 1
      %p53 = por %p51, %p52
      %p55 = scmp.ne.s32.totalorder %s38, %s54
      %p56 = scmp.eq.s32.totalorder %s18, 0
      %p57 = por %p55, %p56
      %s58 = ssub.s32 %s20, %s27
      %p59 = scmp.eq.s32.totalorder %s58, 0
      %s61 = sadd.s32 %s60, 1
      %s62 = scalar_select %p59, %s60, %s61
      %p65 = pneg %p59
      %p66 = scmp.eq.s32.totalorder %s12, 1
      %p67 = por %p65, %p66
      %p68 = scmp.ne.s32.totalorder %s60, %s63
      %p69 = scmp.eq.s32.totalorder %s12, 0
      %p70 = por %p68, %p69
      %p71 = scmp.ne.s32.totalorder %s60, %s63
      %p72 = scmp.eq.s32.totalorder %s17, 1
      %p73 = por %p71, %p72
      %p74 = scmp.ne.s32.totalorder %s63, %s64
      %p75 = scmp.eq.s32.totalorder %s17, 0
      %p76 = por %p74, %p75
      %p77 = scmp.ne.s32.totalorder %s63, %s64
      %p78 = scmp.eq.s32.totalorder %s18, 1
      %p79 = por %p77, %p78
      %p81 = scmp.ne.s32.totalorder %s64, %s80
      %p82 = scmp.eq.s32.totalorder %s18, 0
      %p83 = por %p81, %p82
      %s84 = ssub.s32 %s20, %s27
      %s85 = ssub.s32 %s19, %s31
      %s86 = sor.u32 %s84, %s85
      %p87 = scmp.eq.s32.totalorder %s86, 0
      %s89 = sadd.s32 %s88, 1
      %s90 = scalar_select %p87, %s88, %s89
      %p93 = pneg %p87
      %p94 = scmp.eq.s32.totalorder %s12, 1
      %p95 = por %p93, %p94
      %p96 = scmp.ne.s32.totalorder %s88, %s91
      %p97 = scmp.eq.s32.totalorder %s12, 0
      %p98 = por %p96, %p97
      %p99 = scmp.ne.s32.totalorder %s88, %s91
      %p100 = scmp.eq.s32.totalorder %s17, 1
      %p101 = por %p99, %p100
      %p102 = scmp.ne.s32.totalorder %s91, %s92
      %p103 = scmp.eq.s32.totalorder %s17, 0
      %p104 = por %p102, %p103
      %p105 = scmp.ne.s32.totalorder %s91, %s92
      %p106 = scmp.eq.s32.totalorder %s18, 1
      %p107 = por %p105, %p106
      %p109 = scmp.ne.s32.totalorder %s92, %s108
      %p110 = scmp.eq.s32.totalorder %s18, 0
      %p111 = por %p109, %p110
      %p112 = scmp.le.s32.totalorder 1, %s12
      %p113 = scmp.lt.s32.totalorder %s12, 3
      %p114 = pnand %p112, %p113
      %p115 = pneg %p114
      // Predicated region
      $region9: #{pooling_layer.1} parent=5 // pred_check
        _
      $region10: #{pooling_layer.1} parent=5 // pred_check_branch
        %117 = sbr.rel (%p114) target = $region12
      $region11: #{pooling_layer.1} parent=5 // pred_region
        %s118 = ssub.s32 %s12, 1
        // Predicated region
        $region13: #{pooling_layer.1} parent=11 // pred_check
          %p119 = pneg %p50
        $region14: #{pooling_layer.1} parent=11 // pred_check_branch
          %121 = sbr.rel (%p119) target = $region16
        $region15: #{pooling_layer.1} parent=11 // pred_region
          %s122 = smul.u32 2, %s21
          %124 = vsyncadd [#allocation3], 0
          %s125 = smul.addr %s122, 4
          %s126 = scalar_lea.hbm %s0, %s125
          %s127 = sshll.u32 %s126, 4
          %s128 = int_to_ptr.hbm [resolvable:$true] %s127
          %s129 = sshll.u32 [#allocation2], 4
          %s130 = int_to_ptr.vmem [resolvable:$true] %s129
          %135 = dma.hbm_to_vmem [thread:$0]  %s128, 128, %s130, [#allocation3], 64, 64, 4
        $region16: #{pooling_layer.1} parent=11 // pred_fallthru
          _
      $region12: #{pooling_layer.1} parent=5 // pred_fallthru
        _
      %p136 = scmp.lt.s32.totalorder %s12, 2
      // Predicated region
      $region17: #{pooling_layer.1} parent=5 // pred_check
        %p137 = pneg %p136
      $region18: #{pooling_layer.1} parent=5 // pred_check_branch
        %139 = sbr.rel (%p137) target = $region20
      $region19: #{pooling_layer.1} parent=5 // pred_region
        // Predicated region
        $region21: #{pooling_layer.1} parent=19 // pred_check
          %p140 = pneg %p70
        $region22: #{pooling_layer.1} parent=19 // pred_check_branch
          %142 = sbr.rel (%p140) target = $region24
        $region23: #{pooling_layer.1} parent=19 // pred_region
          %s143 = sand.u32 %s60, 1
          %s144 = scalar_lea.sflag [#allocation5], %s143
          %s145 = sand.u32 %s60, 1
          %s146 = smul.addr %s145, 16
          %s147 = scalar_lea.vmem [#allocation4], %s146
          %149 = vsyncadd %s144, 0
          %s150 = smul.addr %s20, 2
          %s151 = smul.addr %s150, 8
          %s152 = scalar_lea.hbm %s1, %s151
          %s153 = sshll.u32 %s152, 4
          %s154 = int_to_ptr.hbm [resolvable:$true] %s153
          %s155 = sshll.u32 %s147, 4
          %s156 = int_to_ptr.vmem [resolvable:$true] %s155
          %161 = dma.hbm_to_vmem [thread:$0]  %s154, 256, %s156, %s144, 128, 128, 8
        $region24: #{pooling_layer.1} parent=19 // pred_fallthru
          _
      $region20: #{pooling_layer.1} parent=5 // pred_fallthru
        _
      %p162 = scmp.le.s32.totalorder 1, %s12
      %p163 = scmp.lt.s32.totalorder %s12, 3
      %p164 = pnand %p162, %p163
      %p165 = pneg %p164
      // Predicated region
      $region25: #{pooling_layer.1} parent=5 // pred_check
        _
      $region26: #{pooling_layer.1} parent=5 // pred_check_branch
        %167 = sbr.rel (%p164) target = $region28
      $region27: #{pooling_layer.1} parent=5 // pred_region
        %s168 = ssub.s32 %s12, 1
        // Predicated region
        $region29: #{pooling_layer.1} parent=27 // pred_check
          %p169 = pneg %p50
        $region30: #{pooling_layer.1} parent=27 // pred_check_branch
          %171 = sbr.rel (%p169) target = $region32
        $region31: #{pooling_layer.1} parent=27 // pred_region
          %173 = dma.done [#allocation3], 128
        $region32: #{pooling_layer.1} parent=27 // pred_fallthru
          _
        %s174 = sand.u32 %s63, 1
        %s175 = scalar_lea.sflag [#allocation5], %s174
        %s176 = sand.u32 %s63, 1
        %s177 = smul.addr %s176, 16
        %s178 = scalar_lea.vmem [#allocation4], %s177
        // Predicated region
        $region33: #{pooling_layer.1} parent=27 // pred_check
          %p179 = pneg %p76
        $region34: #{pooling_layer.1} parent=27 // pred_check_branch
          %181 = sbr.rel (%p179) target = $region36
        $region35: #{pooling_layer.1} parent=27 // pred_region
          %183 = dma.done %s175, 256
        $region36: #{pooling_layer.1} parent=27 // pred_fallthru
          _
        %p184 = pneg %p50
        %p185 = pneg %p47
        %s186 = sand.u32 %s63, 1
        %s187 = scalar_lea.sflag [#allocation5], %s186
        %s188 = sand.u32 %s63, 1
        %s189 = smul.addr %s188, 16
        %s190 = scalar_lea.vmem [#allocation4], %s189
        %p191 = pneg %p76
        %p192 = pneg %p73
        %p193 = pneg %p104
        %p194 = pneg %p101
        %s195 = smul.u32 2, %s21
        %p196 = scmp.lt.s32.totalorder %s22, 1
        %s197 = scalar_select %p196, %s22, 1
        %p198 = scmp.lt.s32.totalorder %s195, 1
        %s199 = scalar_select %p198, %s195, 1
        %s200 = smul.addr %s197, 2
        %s201 = sadd.s32 %s199, %s200
        %s202 = smul.addr %s201, 8
        %s203 = scalar_lea.vmem %s2, %s202
        %s204 = smul.u32 2, %s21
        %s205 = smul.u32 2, %s21
        %p206 = scmp.lt.s32.totalorder %s22, 1
        %s207 = scalar_select %p206, %s22, 1
        %p208 = scmp.lt.s32.totalorder %s205, 1
        %s209 = scalar_select %p208, %s205, 1
        %s210 = smul.addr %s207, 2
        %s211 = sadd.s32 %s209, %s210
        %s212 = smul.addr %s211, 8
        %s213 = scalar_lea.vmem %s2, %s212
        %s214 = smul.u32 2, %s21
        %v216 = vld [vmem:[%s178] sm:$0xff]
        %v217 = vld [vmem:[%s178 + $0x8] sm:$0xff]
        %v218 = vpack.c.bf16 %v217, %v216
        %v219 = vld [vmem:[#allocation2] sm:$0xf]
        %v220 = vld [vmem:[#allocation2 + $0x4] sm:$0x3]
        %v223 = vunpack.c.l.b16 %v219
        %v224 = vunpack.c.l.b16 %v220
        %v225 = vpack.c.b16 %v224, %v223
        %vm226 = vcmask 130048
        %v228 = vsel %vm226, %v225, 0
        %230 = vmatpush.bf16.msra.mxu0 0
        %231 = vmatpush.bf16.msra.mxu0 0
        %232 = vmatpush.bf16.msra.mxu0 0
        %233 = vmatpush.bf16.msra.mxu0 0
        %234 = vmatpush.bf16.msra.mxu0 0
        %235 = vmatpush.bf16.msra.mxu0 0
        %236 = vmatpush.bf16.msra.mxu0 0
        %237 = vmatpush.bf16.msra.mxu0 %v218
        %238 = vmatmul.bf16.gmra.mxu0 %v228
        %v239 = vpop.f32.mrf.mxu0
        %v240 = vadd.f32 0.0, %v239
        %v241 = vpop.f32.mrf.mxu0
        %v242 = vadd.f32 0.0, %v241
        %243 = vdwg.mxu0
        %244 = vst.msk [vmem:[%s213] sm:$0xff] %vm226, %v240
        %vm245 = vcmask 125952
        %246 = vst.msk [vmem:[%s213 + $0x8] sm:$0xf] %vm245, %v242
        %s247 = smul.u32 2, %s21
        %p248 = scmp.lt.s32.totalorder %s22, 1
        %s249 = scalar_select %p248, %s22, 1
        %p250 = scmp.lt.s32.totalorder %s247, 1
        %s251 = scalar_select %p250, %s247, 1
        %s252 = smul.addr %s249, 2
        %s253 = sadd.s32 %s251, %s252
        %s254 = smul.addr %s253, 8
        %s255 = scalar_lea.vmem %s2, %s254
        // Predicated region
        $region37: #{pooling_layer.1} parent=27 // pred_check
          %p256 = pneg %p101
        $region38: #{pooling_layer.1} parent=27 // pred_check_branch
          %258 = sbr.rel (%p256) target = $region40
        $region39: #{pooling_layer.1} parent=27 // pred_region
          %s259 = smul.u32 2, %s21
        $region40: #{pooling_layer.1} parent=27 // pred_fallthru
          _
      $region28: #{pooling_layer.1} parent=5 // pred_fallthru
        _
      %p260 = scmp.le.s32.totalorder 2, %s12
      // Predicated region
      $region41: #{pooling_layer.1} parent=5 // pred_check
        %p261 = pneg %p260
      $region42: #{pooling_layer.1} parent=5 // pred_check_branch
        %263 = sbr.rel (%p261) target = $region44
      $region43: #{pooling_layer.1} parent=5 // pred_region
        %s264 = ssub.s32 %s12, 2
        // Predicated region
        $region45: #{pooling_layer.1} parent=43 // pred_check
          %p265 = pneg %p107
        $region46: #{pooling_layer.1} parent=43 // pred_check_branch
          %267 = sbr.rel (%p265) target = $region48
        $region47: #{pooling_layer.1} parent=43 // pred_region
          %s268 = smul.u32 2, %s23
          %p269 = scmp.lt.s32.totalorder %s24, 1
          %s270 = scalar_select %p269, %s24, 1
          %p271 = scmp.lt.s32.totalorder %s268, 1
          %s272 = scalar_select %p271, %s268, 1
          %s273 = smul.addr %s270, 2
          %s274 = sadd.s32 %s272, %s273
          %s275 = smul.addr %s274, 8
          %s276 = scalar_lea.vmem %s2, %s275
        $region48: #{pooling_layer.1} parent=43 // pred_fallthru
          _
      $region44: #{pooling_layer.1} parent=5 // pred_fallthru
        _
    $region6: #{pooling_layer.1} parent=1 // loop_footer
      %s16 = sadd.s32 1, %s12
    $region7: #{pooling_layer.1} parent=1 // loop_footer_branch
      %11 = sbr.rel target = $region3
    $region8: #{pooling_layer.1} parent=1 // loop_exit
      _
    %277 = vsyncpa [#allocation3], 1
    %s278 = scalar_lea.sflag [#allocation3], 1
    %279 = vsyncpa %s278, 1
    %280 = vsyncpa [#allocation5], 1
    %s281 = scalar_lea.sflag [#allocation5], 1
    %282 = vsyncpa %s281, 1

</llo_original>
